<compile_context>
chip_gen: v7x
topology: tpu7x:2x2x1
jax: 0.10.0
libtpu: 0.0.40
codegen_flags: <defaults>
</compile_context>

<pallas_src>
import math

import jax
import jax.numpy as jnp
from jax.experimental import pallas as pl
from jax.experimental.pallas import tpu as pltpu

LANE = 128      # lane width -> last-dim padding target
SUBLANE = 8     # sublane width -> batch-tile granularity


def _round_up(x, m):
    return ((x + m - 1) // m) * m


def _fused_mlp_kernel(x_ref, w1, b1, w2, b2, w3, b3, w4, b4, w5, b5, o_ref):
    # x_ref: (tm, in_pad); wi: (din_pad, dout_pad); bi: (1, dout_pad)
    h = x_ref[...]
    h = jnp.maximum(jnp.dot(h, w1[...], preferred_element_type=jnp.float32) + b1[...], 0.0)
    h = jnp.maximum(jnp.dot(h, w2[...], preferred_element_type=jnp.float32) + b2[...], 0.0)
    h = jnp.maximum(jnp.dot(h, w3[...], preferred_element_type=jnp.float32) + b3[...], 0.0)
    h = jnp.maximum(jnp.dot(h, w4[...], preferred_element_type=jnp.float32) + b4[...], 0.0)
    y = jnp.dot(h, w5[...], preferred_element_type=jnp.float32) + b5[...]
    o_ref[...] = y.astype(o_ref.dtype)


def _pad_params(params):
    """Zero-pad every (w, b) so all feature dims are multiples of 128."""
    padded = []
    for (w, b) in params:
        din, dout = w.shape
        din_p = _round_up(din, LANE)
        dout_p = _round_up(dout, LANE)
        w_p = jnp.zeros((din_p, dout_p), w.dtype).at[:din, :dout].set(w)
        b_p = jnp.zeros((1, dout_p), b.dtype).at[0, :dout].set(b)
        padded.append((w_p, b_p))
    return padded


def fused_mlp_forward(params, x, in_dim):
    """Matches: x = linear4block(x.view(-1, in_dim)); x = linear_out(x)."""
    h = x.reshape(-1, in_dim)
    n = h.shape[0]
    out_dim = params[-1][0].shape[1]

    padded = _pad_params(params)
    in_pad = padded[0][0].shape[0]
    out_pad = padded[-1][0].shape[1]

    # Batch tiling: MXU-friendly tiles for real batches (256/512 rows), a
    # single minimal sublane-aligned tile for tiny ones.
    if n >= 512:
        tm = 512
    elif n >= 256:
        tm = 256
    else:
        tm = _round_up(max(n, 1), SUBLANE)
    n_pad = _round_up(n, tm)
    grid = (n_pad // tm,)

    x_p = jnp.zeros((n_pad, in_pad), h.dtype).at[:n, :in_dim].set(h)

    flat_params = []
    param_specs = []
    for (w_p, b_p) in padded:
        flat_params += [w_p, b_p]
        param_specs += [
            # index_map -> (0, 0): parameters stay resident across batch tiles
            pl.BlockSpec(w_p.shape, lambda i: (0, 0)),
            pl.BlockSpec(b_p.shape, lambda i: (0, 0)),
        ]

    flops = 2 * n_pad * sum(int(w.shape[0]) * int(w.shape[1]) for w, _ in padded)
    bytes_accessed = 4 * (
        int(x_p.size)
        + sum(int(w.size) + int(b.size) for w, b in padded)
        + n_pad * out_pad
    )

    y_p = pl.pallas_call(
        _fused_mlp_kernel,
        out_shape=jax.ShapeDtypeStruct((n_pad, out_pad), h.dtype),
        grid=grid,
        in_specs=[pl.BlockSpec((tm, in_pad), lambda i: (i, 0))] + param_specs,
        out_specs=pl.BlockSpec((tm, out_pad), lambda i: (i, 0)),
        compiler_params=pltpu.CompilerParams(
            dimension_semantics=("parallel",),
            vmem_limit_bytes=48 << 20,
        ),
        cost_estimate=pl.CostEstimate(
            flops=flops, transcendentals=0, bytes_accessed=bytes_accessed),
    )(x_p, *flat_params)

    return y_p[:n, :out_dim]


def init_linear_params(key, in_dim, out_dim, dtype=jnp.float32):
    """Deterministic init mimicking nn.Linear's U(-1/sqrt(in), 1/sqrt(in))."""
    kw, kb = jax.random.split(key)
    bound = 1.0 / math.sqrt(in_dim)
    # stored as (in_dim, out_dim) -> transposed relative to PyTorch
    w = jax.random.uniform(kw, (in_dim, out_dim), dtype, -bound, bound)
    b = jax.random.uniform(kb, (out_dim,), dtype, -bound, bound)
    return w, b


def init_mlp_params(key, in_dim, hid1, hid2, hid3, hid4, out_dim):
    dims = [in_dim, hid1, hid2, hid3, hid4, out_dim]
    keys = jax.random.split(key, len(dims) - 1)
    return [init_linear_params(k, d_in, d_out)
            for k, d_in, d_out in zip(keys, dims[:-1], dims[1:])]


if __name__ == "__main__":
    in_dim, hid1, hid2, hid3, hid4, out_dim = 32, 64, 64, 32, 32, 16
    # 3-D input to exercise the x.view(-1, in_dim) semantics: 2*4 = 8 rows
    x_shape = (2, 4, in_dim)

    key = jax.random.PRNGKey(0)
    k_params, k_x = jax.random.split(key)
    params = init_mlp_params(k_params, in_dim, hid1, hid2, hid3, hid4, out_dim)
    x = jax.random.normal(k_x, x_shape, jnp.float32)

    forward = jax.jit(fused_mlp_forward, static_argnums=2)
    y = forward(params, x, in_dim)
    jax.block_until_ready(y)

    # sanity: reference in plain JAX
    h_ref = x.reshape(-1, in_dim)
    for (w, b) in params[:-1]:
        h_ref = jnp.maximum(h_ref @ w + b, 0.0)
    w, b = params[-1]
    y_ref = h_ref @ w + b

    assert y.shape == (x_shape[0] * x_shape[1], out_dim)
    assert jnp.allclose(y, y_ref, atol=1e-5, rtol=1e-5)

    print("KERNEL_OK")
</pallas_src>

<mosaic_0001>
module attributes {stable_mosaic.version = 11 : i64} {
  func.func @_fused_mlp_kernel(%arg0: i32, %arg1: memref<8x128xf32, #tpu.memory_space<vmem>>, %arg2: memref<128x128xf32, #tpu.memory_space<vmem>>, %arg3: memref<1x128xf32, #tpu.memory_space<vmem>>, %arg4: memref<128x128xf32, #tpu.memory_space<vmem>>, %arg5: memref<1x128xf32, #tpu.memory_space<vmem>>, %arg6: memref<128x128xf32, #tpu.memory_space<vmem>>, %arg7: memref<1x128xf32, #tpu.memory_space<vmem>>, %arg8: memref<128x128xf32, #tpu.memory_space<vmem>>, %arg9: memref<1x128xf32, #tpu.memory_space<vmem>>, %arg10: memref<128x128xf32, #tpu.memory_space<vmem>>, %arg11: memref<1x128xf32, #tpu.memory_space<vmem>>, %arg12: memref<8x128xf32, #tpu.memory_space<vmem>>) attributes {dimension_semantics = [#tpu.dimension_semantics<parallel>], iteration_bounds = array<i64: 1>, scalar_prefetch = 0 : i64, scratch_operands = 0 : i64, tpu.core_type = #tpu.core_type<tc>, window_params = [{transform_indices = @transform_0, window_bounds = array<i64: 8, 128>}, {pipeline_mode = #tpu.pipeline_mode<synchronous>, transform_indices = @transform_1, window_bounds = array<i64: 128, 128>}, {pipeline_mode = #tpu.pipeline_mode<synchronous>, transform_indices = @transform_2, window_bounds = array<i64: 1, 128>}, {pipeline_mode = #tpu.pipeline_mode<synchronous>, transform_indices = @transform_3, window_bounds = array<i64: 128, 128>}, {pipeline_mode = #tpu.pipeline_mode<synchronous>, transform_indices = @transform_4, window_bounds = array<i64: 1, 128>}, {pipeline_mode = #tpu.pipeline_mode<synchronous>, transform_indices = @transform_5, window_bounds = array<i64: 128, 128>}, {pipeline_mode = #tpu.pipeline_mode<synchronous>, transform_indices = @transform_6, window_bounds = array<i64: 1, 128>}, {pipeline_mode = #tpu.pipeline_mode<synchronous>, transform_indices = @transform_7, window_bounds = array<i64: 128, 128>}, {pipeline_mode = #tpu.pipeline_mode<synchronous>, transform_indices = @transform_8, window_bounds = array<i64: 1, 128>}, {pipeline_mode = #tpu.pipeline_mode<synchronous>, transform_indices = @transform_9, window_bounds = array<i64: 128, 128>}, {pipeline_mode = #tpu.pipeline_mode<synchronous>, transform_indices = @transform_10, window_bounds = array<i64: 1, 128>}, {transform_indices = @transform_11, window_bounds = array<i64: 8, 128>}]} {
    %c0 = arith.constant 0 : index
    %c0_0 = arith.constant 0 : index
    %0 = vector.load %arg1[%c0, %c0_0] : memref<8x128xf32, #tpu.memory_space<vmem>>, vector<8x128xf32>
    %c0_1 = arith.constant 0 : index
    %c0_2 = arith.constant 0 : index
    %1 = vector.load %arg2[%c0_1, %c0_2] : memref<128x128xf32, #tpu.memory_space<vmem>>, vector<128x128xf32>
    %cst = arith.constant dense<0.000000e+00> : vector<8x128xf32>
    %2 = tpu.matmul %0, %1, %cst {dimension_numbers = #tpu.dot_dimension_numbers<[1], [0], [0], [1], [0, 0, 1, 1], [], []>} : vector<8x128xf32>, vector<128x128xf32>, vector<8x128xf32> -> vector<8x128xf32>
    %c0_3 = arith.constant 0 : index
    %c0_4 = arith.constant 0 : index
    %3 = vector.load %arg3[%c0_3, %c0_4] : memref<1x128xf32, #tpu.memory_space<vmem>>, vector<1x128xf32>
    %4 = vector.broadcast %3 : vector<1x128xf32> to vector<8x128xf32>
    %5 = arith.addf %2, %4 : vector<8x128xf32>
    %cst_5 = arith.constant 0.000000e+00 : f32
    %6 = vector.broadcast %cst_5 : f32 to vector<8x128xf32>
    %7 = arith.maximumf %5, %6 : vector<8x128xf32>
    %c0_6 = arith.constant 0 : index
    %c0_7 = arith.constant 0 : index
    %8 = vector.load %arg4[%c0_6, %c0_7] : memref<128x128xf32, #tpu.memory_space<vmem>>, vector<128x128xf32>
    %cst_8 = arith.constant dense<0.000000e+00> : vector<8x128xf32>
    %9 = tpu.matmul %7, %8, %cst_8 {dimension_numbers = #tpu.dot_dimension_numbers<[1], [0], [0], [1], [0, 0, 1, 1], [], []>} : vector<8x128xf32>, vector<128x128xf32>, vector<8x128xf32> -> vector<8x128xf32>
    %c0_9 = arith.constant 0 : index
    %c0_10 = arith.constant 0 : index
    %10 = vector.load %arg5[%c0_9, %c0_10] : memref<1x128xf32, #tpu.memory_space<vmem>>, vector<1x128xf32>
    %11 = vector.broadcast %10 : vector<1x128xf32> to vector<8x128xf32>
    %12 = arith.addf %9, %11 : vector<8x128xf32>
    %cst_11 = arith.constant 0.000000e+00 : f32
    %13 = vector.broadcast %cst_11 : f32 to vector<8x128xf32>
    %14 = arith.maximumf %12, %13 : vector<8x128xf32>
    %c0_12 = arith.constant 0 : index
    %c0_13 = arith.constant 0 : index
    %15 = vector.load %arg6[%c0_12, %c0_13] : memref<128x128xf32, #tpu.memory_space<vmem>>, vector<128x128xf32>
    %cst_14 = arith.constant dense<0.000000e+00> : vector<8x128xf32>
    %16 = tpu.matmul %14, %15, %cst_14 {dimension_numbers = #tpu.dot_dimension_numbers<[1], [0], [0], [1], [0, 0, 1, 1], [], []>} : vector<8x128xf32>, vector<128x128xf32>, vector<8x128xf32> -> vector<8x128xf32>
    %c0_15 = arith.constant 0 : index
    %c0_16 = arith.constant 0 : index
    %17 = vector.load %arg7[%c0_15, %c0_16] : memref<1x128xf32, #tpu.memory_space<vmem>>, vector<1x128xf32>
    %18 = vector.broadcast %17 : vector<1x128xf32> to vector<8x128xf32>
    %19 = arith.addf %16, %18 : vector<8x128xf32>
    %cst_17 = arith.constant 0.000000e+00 : f32
    %20 = vector.broadcast %cst_17 : f32 to vector<8x128xf32>
    %21 = arith.maximumf %19, %20 : vector<8x128xf32>
    %c0_18 = arith.constant 0 : index
    %c0_19 = arith.constant 0 : index
    %22 = vector.load %arg8[%c0_18, %c0_19] : memref<128x128xf32, #tpu.memory_space<vmem>>, vector<128x128xf32>
    %cst_20 = arith.constant dense<0.000000e+00> : vector<8x128xf32>
    %23 = tpu.matmul %21, %22, %cst_20 {dimension_numbers = #tpu.dot_dimension_numbers<[1], [0], [0], [1], [0, 0, 1, 1], [], []>} : vector<8x128xf32>, vector<128x128xf32>, vector<8x128xf32> -> vector<8x128xf32>
    %c0_21 = arith.constant 0 : index
    %c0_22 = arith.constant 0 : index
    %24 = vector.load %arg9[%c0_21, %c0_22] : memref<1x128xf32, #tpu.memory_space<vmem>>, vector<1x128xf32>
    %25 = vector.broadcast %24 : vector<1x128xf32> to vector<8x128xf32>
    %26 = arith.addf %23, %25 : vector<8x128xf32>
    %cst_23 = arith.constant 0.000000e+00 : f32
    %27 = vector.broadcast %cst_23 : f32 to vector<8x128xf32>
    %28 = arith.maximumf %26, %27 : vector<8x128xf32>
    %c0_24 = arith.constant 0 : index
    %c0_25 = arith.constant 0 : index
    %29 = vector.load %arg10[%c0_24, %c0_25] : memref<128x128xf32, #tpu.memory_space<vmem>>, vector<128x128xf32>
    %cst_26 = arith.constant dense<0.000000e+00> : vector<8x128xf32>
    %30 = tpu.matmul %28, %29, %cst_26 {dimension_numbers = #tpu.dot_dimension_numbers<[1], [0], [0], [1], [0, 0, 1, 1], [], []>} : vector<8x128xf32>, vector<128x128xf32>, vector<8x128xf32> -> vector<8x128xf32>
    %c0_27 = arith.constant 0 : index
    %c0_28 = arith.constant 0 : index
    %31 = vector.load %arg11[%c0_27, %c0_28] : memref<1x128xf32, #tpu.memory_space<vmem>>, vector<1x128xf32>
    %32 = vector.broadcast %31 : vector<1x128xf32> to vector<8x128xf32>
    %33 = arith.addf %30, %32 : vector<8x128xf32>
    %c0_29 = arith.constant 0 : index
    %c0_30 = arith.constant 0 : index
    %34 = vector.load %arg12[%c0_29, %c0_30] : memref<8x128xf32, #tpu.memory_space<vmem>>, vector<8x128xf32>
    tpu.vector_store %arg12[%c0_29, %c0_30], %33 {strides = array<i32>} : memref<8x128xf32, #tpu.memory_space<vmem>>, vector<8x128xf32>,
    return
  }
  func.func @transform_0(%arg0: i32) -> (i32, i32) {
    %c0_i32 = arith.constant 0 : i32
    %c0_i32_0 = arith.constant 0 : i32
    return %arg0, %c0_i32 : i32, i32
  }
  func.func @transform_1(%arg0: i32) -> (i32, i32) {
    %c0_i32 = arith.constant 0 : i32
    %c0_i32_0 = arith.constant 0 : i32
    %c0_i32_1 = arith.constant 0 : i32
    return %c0_i32, %c0_i32_0 : i32, i32
  }
  func.func @transform_2(%arg0: i32) -> (i32, i32) {
    %c0_i32 = arith.constant 0 : i32
    %c0_i32_0 = arith.constant 0 : i32
    %c0_i32_1 = arith.constant 0 : i32
    return %c0_i32, %c0_i32_0 : i32, i32
  }
  func.func @transform_3(%arg0: i32) -> (i32, i32) {
    %c0_i32 = arith.constant 0 : i32
    %c0_i32_0 = arith.constant 0 : i32
    %c0_i32_1 = arith.constant 0 : i32
    return %c0_i32, %c0_i32_0 : i32, i32
  }
  func.func @transform_4(%arg0: i32) -> (i32, i32) {
    %c0_i32 = arith.constant 0 : i32
    %c0_i32_0 = arith.constant 0 : i32
    %c0_i32_1 = arith.constant 0 : i32
    return %c0_i32, %c0_i32_0 : i32, i32
  }
  func.func @transform_5(%arg0: i32) -> (i32, i32) {
    %c0_i32 = arith.constant 0 : i32
    %c0_i32_0 = arith.constant 0 : i32
    %c0_i32_1 = arith.constant 0 : i32
    return %c0_i32, %c0_i32_0 : i32, i32
  }
  func.func @transform_6(%arg0: i32) -> (i32, i32) {
    %c0_i32 = arith.constant 0 : i32
    %c0_i32_0 = arith.constant 0 : i32
    %c0_i32_1 = arith.constant 0 : i32
    return %c0_i32, %c0_i32_0 : i32, i32
  }
  func.func @transform_7(%arg0: i32) -> (i32, i32) {
    %c0_i32 = arith.constant 0 : i32
    %c0_i32_0 = arith.constant 0 : i32
    %c0_i32_1 = arith.constant 0 : i32
    return %c0_i32, %c0_i32_0 : i32, i32
  }
  func.func @transform_8(%arg0: i32) -> (i32, i32) {
    %c0_i32 = arith.constant 0 : i32
    %c0_i32_0 = arith.constant 0 : i32
    %c0_i32_1 = arith.constant 0 : i32
    return %c0_i32, %c0_i32_0 : i32, i32
  }
  func.func @transform_9(%arg0: i32) -> (i32, i32) {
    %c0_i32 = arith.constant 0 : i32
    %c0_i32_0 = arith.constant 0 : i32
    %c0_i32_1 = arith.constant 0 : i32
    return %c0_i32, %c0_i32_0 : i32, i32
  }
  func.func @transform_10(%arg0: i32) -> (i32, i32) {
    %c0_i32 = arith.constant 0 : i32
    %c0_i32_0 = arith.constant 0 : i32
    %c0_i32_1 = arith.constant 0 : i32
    return %c0_i32, %c0_i32_0 : i32, i32
  }
  func.func @transform_11(%arg0: i32) -> (i32, i32) {
    %c0_i32 = arith.constant 0 : i32
    %c0_i32_0 = arith.constant 0 : i32
    return %arg0, %c0_i32 : i32, i32
  }
}

</mosaic_0001>

<llo_original>
// kernel: fused_mlp_forward.1
$region0: #{fused_mlp_forward.1}
  #allocation0 [shape = 'u32[]', space=smem, size = 0x4, offset = 0x4, fixed_abs, tag = 'smem constant byte address 0x4 - core index']
  #allocation1 [shape = 'u32[144,128]{1,0:T(1,128)}', space=vmem, size = 0x12000, scoped, tag = 'internal scratch']
  %s0 = inlined_call_operand.vmem [shape: f32[8,128], index: 0, kind: input, shape index: {}]
  %s1 = inlined_call_operand.vmem [shape: f32[128,128], index: 1, kind: input, shape index: {}]
  %s2 = inlined_call_operand.vmem [shape: f32[1,128], index: 2, kind: input, shape index: {}]
  %s3 = inlined_call_operand.vmem [shape: f32[128,128], index: 3, kind: input, shape index: {}]
  %s4 = inlined_call_operand.vmem [shape: f32[1,128], index: 4, kind: input, shape index: {}]
  %s5 = inlined_call_operand.vmem [shape: f32[128,128], index: 5, kind: input, shape index: {}]
  %s6 = inlined_call_operand.vmem [shape: f32[1,128], index: 6, kind: input, shape index: {}]
  %s7 = inlined_call_operand.vmem [shape: f32[128,128], index: 7, kind: input, shape index: {}]
  %s8 = inlined_call_operand.vmem [shape: f32[1,128], index: 8, kind: input, shape index: {}]
  %s9 = inlined_call_operand.vmem [shape: f32[128,128], index: 9, kind: input, shape index: {}]
  %s10 = inlined_call_operand.vmem [shape: f32[1,128], index: 10, kind: input, shape index: {}]
  %s11 = inlined_call_operand.hbm [shape: f32[8,128], index: 11, kind: output, shape index: {}]
  %s12 = sld [smem:[#allocation0]]
  $region54: #{fused_mlp_forward.1} parent=0
    _
  %s14 = ssub.s32 1, %s12
  %s15 = scalar_select 0, %s14, %s12
  $region1: #{fused_mlp_forward.1} parent=0
    #allocation2 [shape = 'u8[4096]{0}', space=vmem, size = 0x1000, scoped, tag = 'output window, operand 0, single buffered']
    #allocation3 [shape = 's32[1]{0}', space=sflag, size = 0x4, scoped, tag = 'scoped memory for fused_mlp_forward.1']
    %16 = vsyncpa [#allocation3], 0
    // Predicated region
    $region2: #{fused_mlp_forward.1} parent=1 // pred_check
      _
    $region3: #{fused_mlp_forward.1} parent=1 // pred_check_branch
      %18 = sbr.rel (0) target = $region5
    $region4: #{fused_mlp_forward.1} parent=1 // pred_region
      _
    $region5: #{fused_mlp_forward.1} parent=1 // pred_fallthru
      _
    // Predicated region
    $region6: #{fused_mlp_forward.1} parent=1 // pred_check
      _
    $region7: #{fused_mlp_forward.1} parent=1 // pred_check_branch
      %20 = sbr.rel (0) target = $region9
    $region8: #{fused_mlp_forward.1} parent=1 // pred_region
      _
    $region9: #{fused_mlp_forward.1} parent=1 // pred_fallthru
      _
    // Predicated region
    $region10: #{fused_mlp_forward.1} parent=1 // pred_check
      _
    $region11: #{fused_mlp_forward.1} parent=1 // pred_check_branch
      %22 = sbr.rel (0) target = $region13
    $region12: #{fused_mlp_forward.1} parent=1 // pred_region
      _
    $region13: #{fused_mlp_forward.1} parent=1 // pred_fallthru
      _
    // Predicated region
    $region14: #{fused_mlp_forward.1} parent=1 // pred_check
      _
    $region15: #{fused_mlp_forward.1} parent=1 // pred_check_branch
      %24 = sbr.rel (0) target = $region17
    $region16: #{fused_mlp_forward.1} parent=1 // pred_region
      _
    $region17: #{fused_mlp_forward.1} parent=1 // pred_fallthru
      _
    // Predicated region
    $region18: #{fused_mlp_forward.1} parent=1 // pred_check
      _
    $region19: #{fused_mlp_forward.1} parent=1 // pred_check_branch
      %26 = sbr.rel (0) target = $region21
    $region20: #{fused_mlp_forward.1} parent=1 // pred_region
      _
    $region21: #{fused_mlp_forward.1} parent=1 // pred_fallthru
      _
    // Predicated region
    $region22: #{fused_mlp_forward.1} parent=1 // pred_check
      _
    $region23: #{fused_mlp_forward.1} parent=1 // pred_check_branch
      %28 = sbr.rel (0) target = $region25
    $region24: #{fused_mlp_forward.1} parent=1 // pred_region
      _
    $region25: #{fused_mlp_forward.1} parent=1 // pred_fallthru
      _
    // Predicated region
    $region26: #{fused_mlp_forward.1} parent=1 // pred_check
      _
    $region27: #{fused_mlp_forward.1} parent=1 // pred_check_branch
      %30 = sbr.rel (0) target = $region29
    $region28: #{fused_mlp_forward.1} parent=1 // pred_region
      _
    $region29: #{fused_mlp_forward.1} parent=1 // pred_fallthru
      _
    // Predicated region
    $region30: #{fused_mlp_forward.1} parent=1 // pred_check
      _
    $region31: #{fused_mlp_forward.1} parent=1 // pred_check_branch
      %32 = sbr.rel (0) target = $region33
    $region32: #{fused_mlp_forward.1} parent=1 // pred_region
      _
    $region33: #{fused_mlp_forward.1} parent=1 // pred_fallthru
      _
    // Predicated region
    $region34: #{fused_mlp_forward.1} parent=1 // pred_check
      _
    $region35: #{fused_mlp_forward.1} parent=1 // pred_check_branch
      %34 = sbr.rel (0) target = $region37
    $region36: #{fused_mlp_forward.1} parent=1 // pred_region
      _
    $region37: #{fused_mlp_forward.1} parent=1 // pred_fallthru
      _
    // Predicated region
    $region38: #{fused_mlp_forward.1} parent=1 // pred_check
      _
    $region39: #{fused_mlp_forward.1} parent=1 // pred_check_branch
      %36 = sbr.rel (0) target = $region41
    $region40: #{fused_mlp_forward.1} parent=1 // pred_region
      _
    $region41: #{fused_mlp_forward.1} parent=1 // pred_fallthru
      _
    // Predicated region
    $region42: #{fused_mlp_forward.1} parent=1 // pred_check
      _
    $region43: #{fused_mlp_forward.1} parent=1 // pred_check_branch
      %38 = sbr.rel (0) target = $region45
    $region44: #{fused_mlp_forward.1} parent=1 // pred_region
      _
    $region45: #{fused_mlp_forward.1} parent=1 // pred_fallthru
      _
    %v39 = vld [vmem:[%s0] sm:$0xff]
    %v40 = vld [vmem:[%s1] sm:$0xff]
    %v41 = vld [vmem:[%s1 + $0x8] sm:$0xff]
    %v42 = vld [vmem:[%s1 + $0x10] sm:$0xff]
    %v43 = vld [vmem:[%s1 + $0x18] sm:$0xff]
    %v44 = vld [vmem:[%s1 + $0x20] sm:$0xff]
    %v45 = vld [vmem:[%s1 + $0x28] sm:$0xff]
    %v46 = vld [vmem:[%s1 + $0x30] sm:$0xff]
    %v47 = vld [vmem:[%s1 + $0x38] sm:$0xff]
    %v48 = vld [vmem:[%s1 + $0x40] sm:$0xff]
    %v49 = vld [vmem:[%s1 + $0x48] sm:$0xff]
    %v50 = vld [vmem:[%s1 + $0x50] sm:$0xff]
    %v51 = vld [vmem:[%s1 + $0x58] sm:$0xff]
    %v52 = vld [vmem:[%s1 + $0x60] sm:$0xff]
    %v53 = vld [vmem:[%s1 + $0x68] sm:$0xff]
    %v54 = vld [vmem:[%s1 + $0x70] sm:$0xff]
    %v55 = vld [vmem:[%s1 + $0x78] sm:$0xff]
    %v56 = vld [vmem:[%s2] sm:$0x1]
    %v58 = vlaneseq
    %v59 = vshrl.u32 %v58, 7
    %v60 = vsub.s32 0, %v59
    %v61 = vrot.slane %v56, %v60
    %63 = vmatprep.subr.mxu0 0.0
    %64 = vmatpush1.msra.mxu0 %v40
    %65 = vmatprep.subr.mxu0 0.0
    %66 = vmatpush1.msra.mxu0 %v41
    %67 = vmatprep.subr.mxu0 0.0
    %68 = vmatpush1.msra.mxu0 %v42
    %69 = vmatprep.subr.mxu0 0.0
    %70 = vmatpush1.msra.mxu0 %v43
    %71 = vmatprep.subr.mxu0 0.0
    %72 = vmatpush1.msra.mxu0 %v44
    %73 = vmatprep.subr.mxu0 0.0
    %74 = vmatpush1.msra.mxu0 %v45
    %75 = vmatprep.subr.mxu0 0.0
    %76 = vmatpush1.msra.mxu0 %v46
    %77 = vmatprep.subr.mxu0 0.0
    %78 = vmatpush1.msra.mxu0 %v47
    %79 = vmatprep.subr.mxu0 0.0
    %80 = vmatpush1.msra.mxu0 %v48
    %81 = vmatprep.subr.mxu0 0.0
    %82 = vmatpush1.msra.mxu0 %v49
    %83 = vmatprep.subr.mxu0 0.0
    %84 = vmatpush1.msra.mxu0 %v50
    %85 = vmatprep.subr.mxu0 0.0
    %86 = vmatpush1.msra.mxu0 %v51
    %87 = vmatprep.subr.mxu0 0.0
    %88 = vmatpush1.msra.mxu0 %v52
    %89 = vmatprep.subr.mxu0 0.0
    %90 = vmatpush1.msra.mxu0 %v53
    %91 = vmatprep.subr.mxu0 0.0
    %92 = vmatpush1.msra.mxu0 %v54
    %93 = vmatprep.subr.mxu0 0.0
    %94 = vmatpush1.msra.mxu0 %v55
    %95 = vmatprep.subr.mxu0 0.0
    %96 = vmatpush1.msra.mxu0 0.0
    %97 = vmatprep.subr.mxu0 0.0
    %98 = vmatpush1.msra.mxu0 0.0
    %99 = vmatprep.subr.mxu0 0.0
    %100 = vmatpush1.msra.mxu0 0.0
    %101 = vmatprep.subr.mxu0 0.0
    %102 = vmatpush1.msra.mxu0 0.0
    %103 = vmatprep.subr.mxu0 0.0
    %104 = vmatpush1.msra.mxu0 0.0
    %105 = vmatprep.subr.mxu0 0.0
    %106 = vmatpush1.msra.mxu0 0.0
    %107 = vmatprep.subr.mxu0 0.0
    %108 = vmatpush1.msra.mxu0 0.0
    %109 = vmatprep.subr.mxu0 0.0
    %110 = vmatpush1.msra.mxu0 0.0
    %111 = vmatprep.subr.mxu0 0.0
    %112 = vmatpush1.msra.mxu0 0.0
    %113 = vmatprep.subr.mxu0 0.0
    %114 = vmatpush1.msra.mxu0 0.0
    %115 = vmatprep.subr.mxu0 0.0
    %116 = vmatpush1.msra.mxu0 0.0
    %117 = vmatprep.subr.mxu0 0.0
    %118 = vmatpush1.msra.mxu0 0.0
    %119 = vmatprep.subr.mxu0 0.0
    %120 = vmatpush1.msra.mxu0 0.0
    %121 = vmatprep.subr.mxu0 0.0
    %122 = vmatpush1.msra.mxu0 0.0
    %123 = vmatprep.subr.mxu0 0.0
    %124 = vmatpush1.msra.mxu0 0.0
    %125 = vmatprep.subr.mxu0 0.0
    %126 = vmatpush1.msra.mxu0 0.0
    %127 = vmatprep.mubr.f32.mxu0 0.0
    %128 = vmatmul.mubr.f32.gmra.mrb[0].mxu0 %v39
    %v129 = vpop.f32.mrb[0].mxu0
    %v130 = vadd.f32 %v61, %v129
    %v131 = vpop.f32.mrb[0].mxu0
    %132 = vdwg.mxu0
    %v133 = vmax.f32 %v130, 0.0
    %v134 = vld [vmem:[%s3] sm:$0xff]
    %v135 = vld [vmem:[%s3 + $0x8] sm:$0xff]
    %v136 = vld [vmem:[%s3 + $0x10] sm:$0xff]
    %v137 = vld [vmem:[%s3 + $0x18] sm:$0xff]
    %v138 = vld [vmem:[%s3 + $0x20] sm:$0xff]
    %v139 = vld [vmem:[%s3 + $0x28] sm:$0xff]
    %v140 = vld [vmem:[%s3 + $0x30] sm:$0xff]
    %v141 = vld [vmem:[%s3 + $0x38] sm:$0xff]
    %v142 = vld [vmem:[%s3 + $0x40] sm:$0xff]
    %v143 = vld [vmem:[%s3 + $0x48] sm:$0xff]
    %v144 = vld [vmem:[%s3 + $0x50] sm:$0xff]
    %v145 = vld [vmem:[%s3 + $0x58] sm:$0xff]
    %v146 = vld [vmem:[%s3 + $0x60] sm:$0xff]
    %v147 = vld [vmem:[%s3 + $0x68] sm:$0xff]
    %v148 = vld [vmem:[%s3 + $0x70] sm:$0xff]
    %v149 = vld [vmem:[%s3 + $0x78] sm:$0xff]
    %v150 = vld [vmem:[%s4] sm:$0x1]
    %v152 = vlaneseq
    %v153 = vshrl.u32 %v152, 7
    %v154 = vsub.s32 0, %v153
    %v155 = vrot.slane %v150, %v154
    %157 = vmatprep.subr.mxu0 0.0
    %158 = vmatpush1.msra.mxu0 %v134
    %159 = vmatprep.subr.mxu0 0.0
    %160 = vmatpush1.msra.mxu0 %v135
    %161 = vmatprep.subr.mxu0 0.0
    %162 = vmatpush1.msra.mxu0 %v136
    %163 = vmatprep.subr.mxu0 0.0
    %164 = vmatpush1.msra.mxu0 %v137
    %165 = vmatprep.subr.mxu0 0.0
    %166 = vmatpush1.msra.mxu0 %v138
    %167 = vmatprep.subr.mxu0 0.0
    %168 = vmatpush1.msra.mxu0 %v139
    %169 = vmatprep.subr.mxu0 0.0
    %170 = vmatpush1.msra.mxu0 %v140
    %171 = vmatprep.subr.mxu0 0.0
    %172 = vmatpush1.msra.mxu0 %v141
    %173 = vmatprep.subr.mxu0 0.0
    %174 = vmatpush1.msra.mxu0 %v142
    %175 = vmatprep.subr.mxu0 0.0
    %176 = vmatpush1.msra.mxu0 %v143
    %177 = vmatprep.subr.mxu0 0.0
    %178 = vmatpush1.msra.mxu0 %v144
    %179 = vmatprep.subr.mxu0 0.0
    %180 = vmatpush1.msra.mxu0 %v145
    %181 = vmatprep.subr.mxu0 0.0
    %182 = vmatpush1.msra.mxu0 %v146
    %183 = vmatprep.subr.mxu0 0.0
    %184 = vmatpush1.msra.mxu0 %v147
    %185 = vmatprep.subr.mxu0 0.0
    %186 = vmatpush1.msra.mxu0 %v148
    %187 = vmatprep.subr.mxu0 0.0
    %188 = vmatpush1.msra.mxu0 %v149
    %189 = vmatprep.subr.mxu0 0.0
    %190 = vmatpush1.msra.mxu0 0.0
    %191 = vmatprep.subr.mxu0 0.0
    %192 = vmatpush1.msra.mxu0 0.0
    %193 = vmatprep.subr.mxu0 0.0
    %194 = vmatpush1.msra.mxu0 0.0
    %195 = vmatprep.subr.mxu0 0.0
    %196 = vmatpush1.msra.mxu0 0.0
    %197 = vmatprep.subr.mxu0 0.0
    %198 = vmatpush1.msra.mxu0 0.0
    %199 = vmatprep.subr.mxu0 0.0
    %200 = vmatpush1.msra.mxu0 0.0
    %201 = vmatprep.subr.mxu0 0.0
    %202 = vmatpush1.msra.mxu0 0.0
    %203 = vmatprep.subr.mxu0 0.0
    %204 = vmatpush1.msra.mxu0 0.0
    %205 = vmatprep.subr.mxu0 0.0
    %206 = vmatpush1.msra.mxu0 0.0
    %207 = vmatprep.subr.mxu0 0.0
    %208 = vmatpush1.msra.mxu0 0.0
    %209 = vmatprep.subr.mxu0 0.0
    %210 = vmatpush1.msra.mxu0 0.0
    %211 = vmatprep.subr.mxu0 0.0
    %212 = vmatpush1.msra.mxu0 0.0
    %213 = vmatprep.subr.mxu0 0.0
    %214 = vmatpush1.msra.mxu0 0.0
    %215 = vmatprep.subr.mxu0 0.0
    %216 = vmatpush1.msra.mxu0 0.0
    %217 = vmatprep.subr.mxu0 0.0
    %218 = vmatpush1.msra.mxu0 0.0
    %219 = vmatprep.subr.mxu0 0.0
    %220 = vmatpush1.msra.mxu0 0.0
    %221 = vmatprep.mubr.f32.mxu0 0.0
    %222 = vmatmul.mubr.f32.gmra.mrb[0].mxu0 %v133
    %v223 = vpop.f32.mrb[0].mxu0
    %v224 = vadd.f32 %v155, %v223
    %v225 = vpop.f32.mrb[0].mxu0
    %226 = vdwg.mxu0
    %v227 = vmax.f32 %v224, 0.0
    %v228 = vld [vmem:[%s5] sm:$0xff]
    %v229 = vld [vmem:[%s5 + $0x8] sm:$0xff]
    %v230 = vld [vmem:[%s5 + $0x10] sm:$0xff]
    %v231 = vld [vmem:[%s5 + $0x18] sm:$0xff]
    %v232 = vld [vmem:[%s5 + $0x20] sm:$0xff]
    %v233 = vld [vmem:[%s5 + $0x28] sm:$0xff]
    %v234 = vld [vmem:[%s5 + $0x30] sm:$0xff]
    %v235 = vld [vmem:[%s5 + $0x38] sm:$0xff]
    %v236 = vld [vmem:[%s5 + $0x40] sm:$0xff]
    %v237 = vld [vmem:[%s5 + $0x48] sm:$0xff]
    %v238 = vld [vmem:[%s5 + $0x50] sm:$0xff]
    %v239 = vld [vmem:[%s5 + $0x58] sm:$0xff]
    %v240 = vld [vmem:[%s5 + $0x60] sm:$0xff]
    %v241 = vld [vmem:[%s5 + $0x68] sm:$0xff]
    %v242 = vld [vmem:[%s5 + $0x70] sm:$0xff]
    %v243 = vld [vmem:[%s5 + $0x78] sm:$0xff]
    %v244 = vld [vmem:[%s6] sm:$0x1]
    %v246 = vlaneseq
    %v247 = vshrl.u32 %v246, 7
    %v248 = vsub.s32 0, %v247
    %v249 = vrot.slane %v244, %v248
    %251 = vmatprep.subr.mxu0 0.0
    %252 = vmatpush1.msra.mxu0 %v228
    %253 = vmatprep.subr.mxu0 0.0
    %254 = vmatpush1.msra.mxu0 %v229
    %255 = vmatprep.subr.mxu0 0.0
    %256 = vmatpush1.msra.mxu0 %v230
    %257 = vmatprep.subr.mxu0 0.0
    %258 = vmatpush1.msra.mxu0 %v231
    %259 = vmatprep.subr.mxu0 0.0
    %260 = vmatpush1.msra.mxu0 %v232
    %261 = vmatprep.subr.mxu0 0.0
    %262 = vmatpush1.msra.mxu0 %v233
    %263 = vmatprep.subr.mxu0 0.0
    %264 = vmatpush1.msra.mxu0 %v234
    %265 = vmatprep.subr.mxu0 0.0
    %266 = vmatpush1.msra.mxu0 %v235
    %267 = vmatprep.subr.mxu0 0.0
    %268 = vmatpush1.msra.mxu0 %v236
    %269 = vmatprep.subr.mxu0 0.0
    %270 = vmatpush1.msra.mxu0 %v237
    %271 = vmatprep.subr.mxu0 0.0
    %272 = vmatpush1.msra.mxu0 %v238
    %273 = vmatprep.subr.mxu0 0.0
    %274 = vmatpush1.msra.mxu0 %v239
    %275 = vmatprep.subr.mxu0 0.0
    %276 = vmatpush1.msra.mxu0 %v240
    %277 = vmatprep.subr.mxu0 0.0
    %278 = vmatpush1.msra.mxu0 %v241
    %279 = vmatprep.subr.mxu0 0.0
    %280 = vmatpush1.msra.mxu0 %v242
    %281 = vmatprep.subr.mxu0 0.0
    %282 = vmatpush1.msra.mxu0 %v243
    %283 = vmatprep.subr.mxu0 0.0
    %284 = vmatpush1.msra.mxu0 0.0
    %285 = vmatprep.subr.mxu0 0.0
    %286 = vmatpush1.msra.mxu0 0.0
    %287 = vmatprep.subr.mxu0 0.0
    %288 = vmatpush1.msra.mxu0 0.0
    %289 = vmatprep.subr.mxu0 0.0
    %290 = vmatpush1.msra.mxu0 0.0
    %291 = vmatprep.subr.mxu0 0.0
    %292 = vmatpush1.msra.mxu0 0.0
    %293 = vmatprep.subr.mxu0 0.0
    %294 = vmatpush1.msra.mxu0 0.0
    %295 = vmatprep.subr.mxu0 0.0
    %296 = vmatpush1.msra.mxu0 0.0
    %297 = vmatprep.subr.mxu0 0.0
    %298 = vmatpush1.msra.mxu0 0.0
    %299 = vmatprep.subr.mxu0 0.0
    %300 = vmatpush1.msra.mxu0 0.0
    %301 = vmatprep.subr.mxu0 0.0
    %302 = vmatpush1.msra.mxu0 0.0
    %303 = vmatprep.subr.mxu0 0.0
    %304 = vmatpush1.msra.mxu0 0.0
    %305 = vmatprep.subr.mxu0 0.0
    %306 = vmatpush1.msra.mxu0 0.0
    %307 = vmatprep.subr.mxu0 0.0
    %308 = vmatpush1.msra.mxu0 0.0
    %309 = vmatprep.subr.mxu0 0.0
    %310 = vmatpush1.msra.mxu0 0.0
    %311 = vmatprep.subr.mxu0 0.0
    %312 = vmatpush1.msra.mxu0 0.0
    %313 = vmatprep.subr.mxu0 0.0
    %314 = vmatpush1.msra.mxu0 0.0
    %315 = vmatprep.mubr.f32.mxu0 0.0
    %316 = vmatmul.mubr.f32.gmra.mrb[0].mxu0 %v227
    %v317 = vpop.f32.mrb[0].mxu0
    %v318 = vadd.f32 %v249, %v317
    %v319 = vpop.f32.mrb[0].mxu0
    %320 = vdwg.mxu0
    %v321 = vmax.f32 %v318, 0.0
    %v322 = vld [vmem:[%s7] sm:$0xff]
    %v323 = vld [vmem:[%s7 + $0x8] sm:$0xff]
    %v324 = vld [vmem:[%s7 + $0x10] sm:$0xff]
    %v325 = vld [vmem:[%s7 + $0x18] sm:$0xff]
    %v326 = vld [vmem:[%s7 + $0x20] sm:$0xff]
    %v327 = vld [vmem:[%s7 + $0x28] sm:$0xff]
    %v328 = vld [vmem:[%s7 + $0x30] sm:$0xff]
    %v329 = vld [vmem:[%s7 + $0x38] sm:$0xff]
    %v330 = vld [vmem:[%s7 + $0x40] sm:$0xff]
    %v331 = vld [vmem:[%s7 + $0x48] sm:$0xff]
    %v332 = vld [vmem:[%s7 + $0x50] sm:$0xff]
    %v333 = vld [vmem:[%s7 + $0x58] sm:$0xff]
    %v334 = vld [vmem:[%s7 + $0x60] sm:$0xff]
    %v335 = vld [vmem:[%s7 + $0x68] sm:$0xff]
    %v336 = vld [vmem:[%s7 + $0x70] sm:$0xff]
    %v337 = vld [vmem:[%s7 + $0x78] sm:$0xff]
    %v338 = vld [vmem:[%s8] sm:$0x1]
    %v340 = vlaneseq
    %v341 = vshrl.u32 %v340, 7
    %v342 = vsub.s32 0, %v341
    %v343 = vrot.slane %v338, %v342
    %345 = vmatprep.subr.mxu0 0.0
    %346 = vmatpush1.msra.mxu0 %v322
    %347 = vmatprep.subr.mxu0 0.0
    %348 = vmatpush1.msra.mxu0 %v323
    %349 = vmatprep.subr.mxu0 0.0
    %350 = vmatpush1.msra.mxu0 %v324
    %351 = vmatprep.subr.mxu0 0.0
    %352 = vmatpush1.msra.mxu0 %v325
    %353 = vmatprep.subr.mxu0 0.0
    %354 = vmatpush1.msra.mxu0 %v326
    %355 = vmatprep.subr.mxu0 0.0
    %356 = vmatpush1.msra.mxu0 %v327
    %357 = vmatprep.subr.mxu0 0.0
    %358 = vmatpush1.msra.mxu0 %v328
    %359 = vmatprep.subr.mxu0 0.0
    %360 = vmatpush1.msra.mxu0 %v329
    %361 = vmatprep.subr.mxu0 0.0
    %362 = vmatpush1.msra.mxu0 %v330
    %363 = vmatprep.subr.mxu0 0.0
    %364 = vmatpush1.msra.mxu0 %v331
    %365 = vmatprep.subr.mxu0 0.0
    %366 = vmatpush1.msra.mxu0 %v332
    %367 = vmatprep.subr.mxu0 0.0
    %368 = vmatpush1.msra.mxu0 %v333
    %369 = vmatprep.subr.mxu0 0.0
    %370 = vmatpush1.msra.mxu0 %v334
    %371 = vmatprep.subr.mxu0 0.0
    %372 = vmatpush1.msra.mxu0 %v335
    %373 = vmatprep.subr.mxu0 0.0
    %374 = vmatpush1.msra.mxu0 %v336
    %375 = vmatprep.subr.mxu0 0.0
    %376 = vmatpush1.msra.mxu0 %v337
    %377 = vmatprep.subr.mxu0 0.0
    %378 = vmatpush1.msra.mxu0 0.0
    %379 = vmatprep.subr.mxu0 0.0
    %380 = vmatpush1.msra.mxu0 0.0
    %381 = vmatprep.subr.mxu0 0.0
    %382 = vmatpush1.msra.mxu0 0.0
    %383 = vmatprep.subr.mxu0 0.0
    %384 = vmatpush1.msra.mxu0 0.0
    %385 = vmatprep.subr.mxu0 0.0
    %386 = vmatpush1.msra.mxu0 0.0
    %387 = vmatprep.subr.mxu0 0.0
    %388 = vmatpush1.msra.mxu0 0.0
    %389 = vmatprep.subr.mxu0 0.0
    %390 = vmatpush1.msra.mxu0 0.0
    %391 = vmatprep.subr.mxu0 0.0
    %392 = vmatpush1.msra.mxu0 0.0
    %393 = vmatprep.subr.mxu0 0.0
    %394 = vmatpush1.msra.mxu0 0.0
    %395 = vmatprep.subr.mxu0 0.0
    %396 = vmatpush1.msra.mxu0 0.0
    %397 = vmatprep.subr.mxu0 0.0
    %398 = vmatpush1.msra.mxu0 0.0
    %399 = vmatprep.subr.mxu0 0.0
    %400 = vmatpush1.msra.mxu0 0.0
    %401 = vmatprep.subr.mxu0 0.0
    %402 = vmatpush1.msra.mxu0 0.0
    %403 = vmatprep.subr.mxu0 0.0
    %404 = vmatpush1.msra.mxu0 0.0
    %405 = vmatprep.subr.mxu0 0.0
    %406 = vmatpush1.msra.mxu0 0.0
    %407 = vmatprep.subr.mxu0 0.0
    %408 = vmatpush1.msra.mxu0 0.0
    %409 = vmatprep.mubr.f32.mxu0 0.0
    %410 = vmatmul.mubr.f32.gmra.mrb[0].mxu0 %v321
    %v411 = vpop.f32.mrb[0].mxu0
    %v412 = vadd.f32 %v343, %v411
    %v413 = vpop.f32.mrb[0].mxu0
    %414 = vdwg.mxu0
    %v415 = vmax.f32 %v412, 0.0
    %v416 = vld [vmem:[%s9] sm:$0xff]
    %v417 = vld [vmem:[%s9 + $0x8] sm:$0xff]
    %v418 = vld [vmem:[%s9 + $0x10] sm:$0xff]
    %v419 = vld [vmem:[%s9 + $0x18] sm:$0xff]
    %v420 = vld [vmem:[%s9 + $0x20] sm:$0xff]
    %v421 = vld [vmem:[%s9 + $0x28] sm:$0xff]
    %v422 = vld [vmem:[%s9 + $0x30] sm:$0xff]
    %v423 = vld [vmem:[%s9 + $0x38] sm:$0xff]
    %v424 = vld [vmem:[%s9 + $0x40] sm:$0xff]
    %v425 = vld [vmem:[%s9 + $0x48] sm:$0xff]
    %v426 = vld [vmem:[%s9 + $0x50] sm:$0xff]
    %v427 = vld [vmem:[%s9 + $0x58] sm:$0xff]
    %v428 = vld [vmem:[%s9 + $0x60] sm:$0xff]
    %v429 = vld [vmem:[%s9 + $0x68] sm:$0xff]
    %v430 = vld [vmem:[%s9 + $0x70] sm:$0xff]
    %v431 = vld [vmem:[%s9 + $0x78] sm:$0xff]
    %v432 = vld [vmem:[%s10] sm:$0x1]
    %v434 = vlaneseq
    %v435 = vshrl.u32 %v434, 7
    %v436 = vsub.s32 0, %v435
    %v437 = vrot.slane %v432, %v436
    %439 = vmatprep.subr.mxu0 0.0
    %440 = vmatpush1.msra.mxu0 %v416
    %441 = vmatprep.subr.mxu0 0.0
    %442 = vmatpush1.msra.mxu0 %v417
    %443 = vmatprep.subr.mxu0 0.0
    %444 = vmatpush1.msra.mxu0 %v418
    %445 = vmatprep.subr.mxu0 0.0
    %446 = vmatpush1.msra.mxu0 %v419
    %447 = vmatprep.subr.mxu0 0.0
    %448 = vmatpush1.msra.mxu0 %v420
    %449 = vmatprep.subr.mxu0 0.0
    %450 = vmatpush1.msra.mxu0 %v421
    %451 = vmatprep.subr.mxu0 0.0
    %452 = vmatpush1.msra.mxu0 %v422
    %453 = vmatprep.subr.mxu0 0.0
    %454 = vmatpush1.msra.mxu0 %v423
    %455 = vmatprep.subr.mxu0 0.0
    %456 = vmatpush1.msra.mxu0 %v424
    %457 = vmatprep.subr.mxu0 0.0
    %458 = vmatpush1.msra.mxu0 %v425
    %459 = vmatprep.subr.mxu0 0.0
    %460 = vmatpush1.msra.mxu0 %v426
    %461 = vmatprep.subr.mxu0 0.0
    %462 = vmatpush1.msra.mxu0 %v427
    %463 = vmatprep.subr.mxu0 0.0
    %464 = vmatpush1.msra.mxu0 %v428
    %465 = vmatprep.subr.mxu0 0.0
    %466 = vmatpush1.msra.mxu0 %v429
    %467 = vmatprep.subr.mxu0 0.0
    %468 = vmatpush1.msra.mxu0 %v430
    %469 = vmatprep.subr.mxu0 0.0
    %470 = vmatpush1.msra.mxu0 %v431
    %471 = vmatprep.subr.mxu0 0.0
    %472 = vmatpush1.msra.mxu0 0.0
    %473 = vmatprep.subr.mxu0 0.0
    %474 = vmatpush1.msra.mxu0 0.0
    %475 = vmatprep.subr.mxu0 0.0
    %476 = vmatpush1.msra.mxu0 0.0
    %477 = vmatprep.subr.mxu0 0.0
    %478 = vmatpush1.msra.mxu0 0.0
    %479 = vmatprep.subr.mxu0 0.0
    %480 = vmatpush1.msra.mxu0 0.0
    %481 = vmatprep.subr.mxu0 0.0
    %482 = vmatpush1.msra.mxu0 0.0
    %483 = vmatprep.subr.mxu0 0.0
    %484 = vmatpush1.msra.mxu0 0.0
    %485 = vmatprep.subr.mxu0 0.0
    %486 = vmatpush1.msra.mxu0 0.0
    %487 = vmatprep.subr.mxu0 0.0
    %488 = vmatpush1.msra.mxu0 0.0
    %489 = vmatprep.subr.mxu0 0.0
    %490 = vmatpush1.msra.mxu0 0.0
    %491 = vmatprep.subr.mxu0 0.0
    %492 = vmatpush1.msra.mxu0 0.0
    %493 = vmatprep.subr.mxu0 0.0
    %494 = vmatpush1.msra.mxu0 0.0
    %495 = vmatprep.subr.mxu0 0.0
    %496 = vmatpush1.msra.mxu0 0.0
    %497 = vmatprep.subr.mxu0 0.0
    %498 = vmatpush1.msra.mxu0 0.0
    %499 = vmatprep.subr.mxu0 0.0
    %500 = vmatpush1.msra.mxu0 0.0
    %501 = vmatprep.subr.mxu0 0.0
    %502 = vmatpush1.msra.mxu0 0.0
    %503 = vmatprep.mubr.f32.mxu0 0.0
    %504 = vmatmul.mubr.f32.gmra.mrb[0].mxu0 %v415
    %v505 = vpop.f32.mrb[0].mxu0
    %v506 = vadd.f32 %v437, %v505
    %v507 = vpop.f32.mrb[0].mxu0
    %508 = vdwg.mxu0
    %509 = vst [vmem:[#allocation2] sm:$0xff] %v506
    // Predicated region
    $region46: #{fused_mlp_forward.1} parent=1 // pred_check
      _
    $region47: #{fused_mlp_forward.1} parent=1 // pred_check_branch
      %511 = sbr.rel (0) target = $region49
    $region48: #{fused_mlp_forward.1} parent=1 // pred_region
      %s513 = ssub.s32 128, 128
      %514 = vsyncadd [#allocation3], %s513
      %s516 = sshll.u32 [#allocation2], 4
      %s517 = int_to_ptr.vmem [resolvable:$true] %s516
      %519 = dma.vmem_to_hbm [thread:$0]  %s517, 128, %s11, [#allocation3]
    $region49: #{fused_mlp_forward.1} parent=1 // pred_fallthru
      _
    // Predicated region
    $region50: #{fused_mlp_forward.1} parent=1 // pred_check
      _
    $region51: #{fused_mlp_forward.1} parent=1 // pred_check_branch
      %521 = sbr.rel (0) target = $region53
    $region52: #{fused_mlp_forward.1} parent=1 // pred_region
      %522 = dma.done [#allocation3], 128
    $region53: #{fused_mlp_forward.1} parent=1 // pred_fallthru
      _
    %523 = vsyncpa [#allocation3], 1

</llo_original>
